<compile_context>
chip_gen: v7x
topology: tpu7x:2x2x1
jax: 0.10.0
libtpu: 0.0.40
codegen_flags: <defaults>
</compile_context>

<pallas_src>
import functools

import jax
import jax.numpy as jnp
from jax import lax
from jax.experimental import pallas as pl
from jax.experimental.pallas import tpu as pltpu

HIDDEN_SIZE = 8
EMBED_SIZE = 10


def _rnn_kernel(tok_ref, emb_ref, wih_ref, whh_ref, b_ref, wout_ref, bout_ref,
                out_ref, hs_ref, *, B, T):
    """Fully fused forward.

    tok_ref : (T*B, 1)  int32, VMEM  token ids, t-major (row = t*B + b)
    emb_ref : (D, E)    f32,   VMEM  embedding table
    wih_ref : (E, H)    f32,   VMEM  input->hidden weight (transposed vs torch)
    whh_ref : (H, H)    f32,   VMEM  hidden->hidden weight (transposed vs torch)
    b_ref   : (1, H)    f32,   VMEM  folded bias (b_ih + b_hh)
    wout_ref: (H, C)    f32,   VMEM  output Linear weight (transposed vs torch)
    bout_ref: (1, C)    f32,   VMEM
    out_ref : (B*T, C)  f32,   VMEM  logits, rows ordered b*T + t (== torch view(-1, H))
    hs_ref  : (B*T, H)  f32,   VMEM scratch  hidden states in b*T + t row order
    """
    D = emb_ref.shape[0]
    H = whh_ref.shape[0]

    # (1) Hoisted embedding gather + input projection as two MXU matmuls.
    #     One-hot gather: out-of-range ids -> all-zero row (no unsafe VMEM access).
    tok = tok_ref[...]                                          # (T*B, 1) int32
    iota = lax.broadcasted_iota(jnp.int32, (T * B, D), 1)       # (T*B, D)
    one_hot = (iota == tok).astype(jnp.float32)                 # (T*B, D)
    xe = jnp.dot(one_hot, emb_ref[...],
                 preferred_element_type=jnp.float32)            # (T*B, E) == gathered emb
    x_all = jnp.dot(xe, wih_ref[...],
                    preferred_element_type=jnp.float32) + b_ref[...]   # (T*B, H)

    w_hh = whh_ref[...]  # hoist loop-invariant load

    # (2) Recurrence, fully unrolled (T static & small).  Critical path per step is
    #     one MXU matmul + one EUP tanh; the B row stores go to the vst slot and
    #     overlap with the next step.
    h = jnp.zeros((B, H), jnp.float32)  # == torch.zeros(1, B, hidden_size)
    for t in range(T):
        x_t = x_all[t * B:(t + 1) * B, :]                        # static slice
        if t == 0:
            h = jnp.tanh(x_t)                                    # h0 == 0 exactly
        else:
            h = jnp.tanh(
                x_t + jnp.dot(h, w_hh, preferred_element_type=jnp.float32))
        # Scatter into torch's batch_first view(-1, H) row order: row = b*T + t.
        for b in range(B):
            hs_ref[pl.ds(b * T + t, 1), :] = h[b:b + 1, :]

    # (3) Hoisted output Linear: one (B*T, H) @ (H, C) matmul + a single store.
    out_ref[...] = (
        jnp.dot(hs_ref[...], wout_ref[...], preferred_element_type=jnp.float32)
        + bout_ref[...]).astype(out_ref.dtype)


def init_params(key, dictionary_size, num_class):
    """Deterministic parameter init matching the torch module's shapes."""
    ks = jax.random.split(key, 7)
    h, e, c = HIDDEN_SIZE, EMBED_SIZE, num_class
    bound = 1.0 / jnp.sqrt(jnp.float32(h))
    emb = jax.random.normal(ks[0], (dictionary_size, e), jnp.float32)
    # Stored pre-transposed relative to torch (torch keeps (H, E)/(H, H)/(C, H)).
    w_ih = jax.random.uniform(ks[1], (e, h), jnp.float32, -bound, bound)
    w_hh = jax.random.uniform(ks[2], (h, h), jnp.float32, -bound, bound)
    b_ih = jax.random.uniform(ks[3], (1, h), jnp.float32, -bound, bound)
    b_hh = jax.random.uniform(ks[4], (1, h), jnp.float32, -bound, bound)
    w_out = jax.random.uniform(ks[5], (h, c), jnp.float32, -bound, bound)
    b_out = jax.random.uniform(ks[6], (1, c), jnp.float32, -bound, bound)
    return emb, w_ih, w_hh, b_ih, b_hh, w_out, b_out


def rnn_model_forward(tokens, params):
    """tokens: (B, T) int -> (B*T, num_class) float32 (torch view(-1, H) row order)."""
    emb, w_ih, w_hh, b_ih, b_hh, w_out, b_out = params
    B, T = tokens.shape
    H = w_hh.shape[0]
    C = w_out.shape[1]
    b_comb = b_ih + b_hh  # pre-folded RNN biases

    # t-major flattened token ids (row = t*B + b): tiny (B, T) int transpose, lets the
    # kernel read per-step inputs as contiguous static slices.
    tok_flat = jnp.transpose(tokens.astype(jnp.int32)).reshape(T * B, 1)

    vmem = pl.BlockSpec(memory_space=pltpu.MemorySpace.VMEM)
    kernel = functools.partial(_rnn_kernel, B=B, T=T)
    return pl.pallas_call(
        kernel,
        out_shape=jax.ShapeDtypeStruct((B * T, C), jnp.float32),
        in_specs=[vmem] * 7,
        out_specs=vmem,
        scratch_shapes=[pltpu.VMEM((B * T, H), jnp.float32)],
    )(tok_flat, emb, w_ih, w_hh, b_comb, w_out, b_out)


def _reference_forward(tokens, params):
    """Pure-JAX reference of the torch forward, for correctness check."""
    emb, w_ih, w_hh, b_ih, b_hh, w_out, b_out = params
    B, T = tokens.shape
    xe = jnp.take(emb, tokens, axis=0).astype(jnp.float32)  # (B, T, E)

    def step(h, x_t):
        h_new = jnp.tanh(x_t @ w_ih + b_ih + h @ w_hh + b_hh)
        return h_new, h_new

    h0 = jnp.zeros((B, HIDDEN_SIZE), jnp.float32)
    _, hs = lax.scan(step, h0, jnp.transpose(xe, (1, 0, 2)))  # (T, B, H)
    hs = jnp.transpose(hs, (1, 0, 2)).reshape(B * T, HIDDEN_SIZE)
    return hs @ w_out + b_out


if __name__ == "__main__":
    dictionary_size = 50
    num_class = 4
    B, T = 2, 8

    key = jax.random.PRNGKey(0)
    k_tok, k_par = jax.random.split(key)
    tokens = jax.random.randint(k_tok, (B, T), 0, dictionary_size, jnp.int32)
    params = init_params(k_par, dictionary_size, num_class)

    out = rnn_model_forward(tokens, params)
    out = jax.block_until_ready(out)
    assert out.shape == (B * T, num_class), out.shape

    ref = jax.block_until_ready(_reference_forward(tokens, params))
    assert jnp.allclose(out, ref, atol=1e-5, rtol=1e-5), "mismatch vs reference"

    print("KERNEL_OK")
</pallas_src>

<mosaic_0001>
module attributes {stable_mosaic.version = 11 : i64} {
  func.func @_rnn_kernel(%arg0: memref<16x1xi32, #tpu.memory_space<vmem>>, %arg1: memref<50x10xf32, #tpu.memory_space<vmem>>, %arg2: memref<10x8xf32, #tpu.memory_space<vmem>>, %arg3: memref<8x8xf32, #tpu.memory_space<vmem>>, %arg4: memref<1x8xf32, #tpu.memory_space<vmem>>, %arg5: memref<8x4xf32, #tpu.memory_space<vmem>>, %arg6: memref<1x4xf32, #tpu.memory_space<vmem>>, %arg7: memref<16x4xf32, #tpu.memory_space<vmem>>, %arg8: memref<16x8xf32, #tpu.memory_space<vmem>>) attributes {dimension_semantics = [], scalar_prefetch = 0 : i64, scratch_operands = 1 : i64, tpu.core_type = #tpu.core_type<tc>} {
    %c0 = arith.constant 0 : index
    %c0_0 = arith.constant 0 : index
    %0 = vector.load %arg0[%c0, %c0_0] : memref<16x1xi32, #tpu.memory_space<vmem>>, vector<16x1xi32>
    %1 = tpu.iota {dimensions = array<i32: 1>} : vector<16x50xi32>
    %2 = vector.broadcast %0 : vector<16x1xi32> to vector<16x50xi32>
    %3 = arith.cmpi eq, %1, %2 : vector<16x50xi32>
    %4 = arith.extui %3 : vector<16x50xi1> to vector<16x50xi32>
    %5 = arith.sitofp %4 : vector<16x50xi32> to vector<16x50xf32>
    %c0_1 = arith.constant 0 : index
    %c0_2 = arith.constant 0 : index
    %6 = vector.load %arg1[%c0_1, %c0_2] : memref<50x10xf32, #tpu.memory_space<vmem>>, vector<50x10xf32>
    %cst = arith.constant dense<0.000000e+00> : vector<16x10xf32>
    %7 = tpu.matmul %5, %6, %cst {dimension_numbers = #tpu.dot_dimension_numbers<[1], [0], [0], [1], [0, 0, 1, 1], [], []>} : vector<16x50xf32>, vector<50x10xf32>, vector<16x10xf32> -> vector<16x10xf32>
    %c0_3 = arith.constant 0 : index
    %c0_4 = arith.constant 0 : index
    %8 = vector.load %arg2[%c0_3, %c0_4] : memref<10x8xf32, #tpu.memory_space<vmem>>, vector<10x8xf32>
    %cst_5 = arith.constant dense<0.000000e+00> : vector<16x8xf32>
    %9 = tpu.matmul %7, %8, %cst_5 {dimension_numbers = #tpu.dot_dimension_numbers<[1], [0], [0], [1], [0, 0, 1, 1], [], []>} : vector<16x10xf32>, vector<10x8xf32>, vector<16x8xf32> -> vector<16x8xf32>
    %c0_6 = arith.constant 0 : index
    %c0_7 = arith.constant 0 : index
    %10 = vector.load %arg4[%c0_6, %c0_7] : memref<1x8xf32, #tpu.memory_space<vmem>>, vector<1x8xf32>
    %11 = vector.broadcast %10 : vector<1x8xf32> to vector<16x8xf32>
    %12 = arith.addf %9, %11 : vector<16x8xf32>
    %c0_8 = arith.constant 0 : index
    %c0_9 = arith.constant 0 : index
    %13 = vector.load %arg3[%c0_8, %c0_9] : memref<8x8xf32, #tpu.memory_space<vmem>>, vector<8x8xf32>
    %14 = vector.extract_strided_slice %12 {offsets = [0, 0], sizes = [2, 8], strides = [1, 1]} : vector<16x8xf32> to vector<2x8xf32>
    %15 = math.tanh %14 : vector<2x8xf32>
    %16 = vector.extract_strided_slice %15 {offsets = [0, 0], sizes = [1, 8], strides = [1, 1]} : vector<2x8xf32> to vector<1x8xf32>
    %c0_10 = arith.constant 0 : index
    %c0_11 = arith.constant 0 : index
    %17 = vector.load %arg8[%c0_10, %c0_11] : memref<16x8xf32, #tpu.memory_space<vmem>>, vector<1x8xf32>
    tpu.vector_store %arg8[%c0_10, %c0_11], %16 {strides = array<i32>} : memref<16x8xf32, #tpu.memory_space<vmem>>, vector<1x8xf32>,
    %18 = vector.extract_strided_slice %15 {offsets = [1, 0], sizes = [1, 8], strides = [1, 1]} : vector<2x8xf32> to vector<1x8xf32>
    %c8 = arith.constant 8 : index
    %c0_12 = arith.constant 0 : index
    %19 = vector.load %arg8[%c8, %c0_12] : memref<16x8xf32, #tpu.memory_space<vmem>>, vector<1x8xf32>
    tpu.vector_store %arg8[%c8, %c0_12], %18 {strides = array<i32>} : memref<16x8xf32, #tpu.memory_space<vmem>>, vector<1x8xf32>,
    %20 = vector.extract_strided_slice %12 {offsets = [2, 0], sizes = [2, 8], strides = [1, 1]} : vector<16x8xf32> to vector<2x8xf32>
    %cst_13 = arith.constant dense<0.000000e+00> : vector<2x8xf32>
    %21 = tpu.matmul %15, %13, %cst_13 {dimension_numbers = #tpu.dot_dimension_numbers<[1], [0], [0], [1], [0, 0, 1, 1], [], []>} : vector<2x8xf32>, vector<8x8xf32>, vector<2x8xf32> -> vector<2x8xf32>
    %22 = arith.addf %20, %21 : vector<2x8xf32>
    %23 = math.tanh %22 : vector<2x8xf32>
    %24 = vector.extract_strided_slice %23 {offsets = [0, 0], sizes = [1, 8], strides = [1, 1]} : vector<2x8xf32> to vector<1x8xf32>
    %c1 = arith.constant 1 : index
    %c0_14 = arith.constant 0 : index
    %25 = vector.load %arg8[%c1, %c0_14] : memref<16x8xf32, #tpu.memory_space<vmem>>, vector<1x8xf32>
    tpu.vector_store %arg8[%c1, %c0_14], %24 {strides = array<i32>} : memref<16x8xf32, #tpu.memory_space<vmem>>, vector<1x8xf32>,
    %26 = vector.extract_strided_slice %23 {offsets = [1, 0], sizes = [1, 8], strides = [1, 1]} : vector<2x8xf32> to vector<1x8xf32>
    %c9 = arith.constant 9 : index
    %c0_15 = arith.constant 0 : index
    %27 = vector.load %arg8[%c9, %c0_15] : memref<16x8xf32, #tpu.memory_space<vmem>>, vector<1x8xf32>
    tpu.vector_store %arg8[%c9, %c0_15], %26 {strides = array<i32>} : memref<16x8xf32, #tpu.memory_space<vmem>>, vector<1x8xf32>,
    %28 = vector.extract_strided_slice %12 {offsets = [4, 0], sizes = [2, 8], strides = [1, 1]} : vector<16x8xf32> to vector<2x8xf32>
    %cst_16 = arith.constant dense<0.000000e+00> : vector<2x8xf32>
    %29 = tpu.matmul %23, %13, %cst_16 {dimension_numbers = #tpu.dot_dimension_numbers<[1], [0], [0], [1], [0, 0, 1, 1], [], []>} : vector<2x8xf32>, vector<8x8xf32>, vector<2x8xf32> -> vector<2x8xf32>
    %30 = arith.addf %28, %29 : vector<2x8xf32>
    %31 = math.tanh %30 : vector<2x8xf32>
    %32 = vector.extract_strided_slice %31 {offsets = [0, 0], sizes = [1, 8], strides = [1, 1]} : vector<2x8xf32> to vector<1x8xf32>
    %c2 = arith.constant 2 : index
    %c0_17 = arith.constant 0 : index
    %33 = vector.load %arg8[%c2, %c0_17] : memref<16x8xf32, #tpu.memory_space<vmem>>, vector<1x8xf32>
    tpu.vector_store %arg8[%c2, %c0_17], %32 {strides = array<i32>} : memref<16x8xf32, #tpu.memory_space<vmem>>, vector<1x8xf32>,
    %34 = vector.extract_strided_slice %31 {offsets = [1, 0], sizes = [1, 8], strides = [1, 1]} : vector<2x8xf32> to vector<1x8xf32>
    %c10 = arith.constant 10 : index
    %c0_18 = arith.constant 0 : index
    %35 = vector.load %arg8[%c10, %c0_18] : memref<16x8xf32, #tpu.memory_space<vmem>>, vector<1x8xf32>
    tpu.vector_store %arg8[%c10, %c0_18], %34 {strides = array<i32>} : memref<16x8xf32, #tpu.memory_space<vmem>>, vector<1x8xf32>,
    %36 = vector.extract_strided_slice %12 {offsets = [6, 0], sizes = [2, 8], strides = [1, 1]} : vector<16x8xf32> to vector<2x8xf32>
    %cst_19 = arith.constant dense<0.000000e+00> : vector<2x8xf32>
    %37 = tpu.matmul %31, %13, %cst_19 {dimension_numbers = #tpu.dot_dimension_numbers<[1], [0], [0], [1], [0, 0, 1, 1], [], []>} : vector<2x8xf32>, vector<8x8xf32>, vector<2x8xf32> -> vector<2x8xf32>
    %38 = arith.addf %36, %37 : vector<2x8xf32>
    %39 = math.tanh %38 : vector<2x8xf32>
    %40 = vector.extract_strided_slice %39 {offsets = [0, 0], sizes = [1, 8], strides = [1, 1]} : vector<2x8xf32> to vector<1x8xf32>
    %c3 = arith.constant 3 : index
    %c0_20 = arith.constant 0 : index
    %41 = vector.load %arg8[%c3, %c0_20] : memref<16x8xf32, #tpu.memory_space<vmem>>, vector<1x8xf32>
    tpu.vector_store %arg8[%c3, %c0_20], %40 {strides = array<i32>} : memref<16x8xf32, #tpu.memory_space<vmem>>, vector<1x8xf32>,
    %42 = vector.extract_strided_slice %39 {offsets = [1, 0], sizes = [1, 8], strides = [1, 1]} : vector<2x8xf32> to vector<1x8xf32>
    %c11 = arith.constant 11 : index
    %c0_21 = arith.constant 0 : index
    %43 = vector.load %arg8[%c11, %c0_21] : memref<16x8xf32, #tpu.memory_space<vmem>>, vector<1x8xf32>
    tpu.vector_store %arg8[%c11, %c0_21], %42 {strides = array<i32>} : memref<16x8xf32, #tpu.memory_space<vmem>>, vector<1x8xf32>,
    %44 = vector.extract_strided_slice %12 {offsets = [8, 0], sizes = [2, 8], strides = [1, 1]} : vector<16x8xf32> to vector<2x8xf32>
    %cst_22 = arith.constant dense<0.000000e+00> : vector<2x8xf32>
    %45 = tpu.matmul %39, %13, %cst_22 {dimension_numbers = #tpu.dot_dimension_numbers<[1], [0], [0], [1], [0, 0, 1, 1], [], []>} : vector<2x8xf32>, vector<8x8xf32>, vector<2x8xf32> -> vector<2x8xf32>
    %46 = arith.addf %44, %45 : vector<2x8xf32>
    %47 = math.tanh %46 : vector<2x8xf32>
    %48 = vector.extract_strided_slice %47 {offsets = [0, 0], sizes = [1, 8], strides = [1, 1]} : vector<2x8xf32> to vector<1x8xf32>
    %c4 = arith.constant 4 : index
    %c0_23 = arith.constant 0 : index
    %49 = vector.load %arg8[%c4, %c0_23] : memref<16x8xf32, #tpu.memory_space<vmem>>, vector<1x8xf32>
    tpu.vector_store %arg8[%c4, %c0_23], %48 {strides = array<i32>} : memref<16x8xf32, #tpu.memory_space<vmem>>, vector<1x8xf32>,
    %50 = vector.extract_strided_slice %47 {offsets = [1, 0], sizes = [1, 8], strides = [1, 1]} : vector<2x8xf32> to vector<1x8xf32>
    %c12 = arith.constant 12 : index
    %c0_24 = arith.constant 0 : index
    %51 = vector.load %arg8[%c12, %c0_24] : memref<16x8xf32, #tpu.memory_space<vmem>>, vector<1x8xf32>
    tpu.vector_store %arg8[%c12, %c0_24], %50 {strides = array<i32>} : memref<16x8xf32, #tpu.memory_space<vmem>>, vector<1x8xf32>,
    %52 = vector.extract_strided_slice %12 {offsets = [10, 0], sizes = [2, 8], strides = [1, 1]} : vector<16x8xf32> to vector<2x8xf32>
    %cst_25 = arith.constant dense<0.000000e+00> : vector<2x8xf32>
    %53 = tpu.matmul %47, %13, %cst_25 {dimension_numbers = #tpu.dot_dimension_numbers<[1], [0], [0], [1], [0, 0, 1, 1], [], []>} : vector<2x8xf32>, vector<8x8xf32>, vector<2x8xf32> -> vector<2x8xf32>
    %54 = arith.addf %52, %53 : vector<2x8xf32>
    %55 = math.tanh %54 : vector<2x8xf32>
    %56 = vector.extract_strided_slice %55 {offsets = [0, 0], sizes = [1, 8], strides = [1, 1]} : vector<2x8xf32> to vector<1x8xf32>
    %c5 = arith.constant 5 : index
    %c0_26 = arith.constant 0 : index
    %57 = vector.load %arg8[%c5, %c0_26] : memref<16x8xf32, #tpu.memory_space<vmem>>, vector<1x8xf32>
    tpu.vector_store %arg8[%c5, %c0_26], %56 {strides = array<i32>} : memref<16x8xf32, #tpu.memory_space<vmem>>, vector<1x8xf32>,
    %58 = vector.extract_strided_slice %55 {offsets = [1, 0], sizes = [1, 8], strides = [1, 1]} : vector<2x8xf32> to vector<1x8xf32>
    %c13 = arith.constant 13 : index
    %c0_27 = arith.constant 0 : index
    %59 = vector.load %arg8[%c13, %c0_27] : memref<16x8xf32, #tpu.memory_space<vmem>>, vector<1x8xf32>
    tpu.vector_store %arg8[%c13, %c0_27], %58 {strides = array<i32>} : memref<16x8xf32, #tpu.memory_space<vmem>>, vector<1x8xf32>,
    %60 = vector.extract_strided_slice %12 {offsets = [12, 0], sizes = [2, 8], strides = [1, 1]} : vector<16x8xf32> to vector<2x8xf32>
    %cst_28 = arith.constant dense<0.000000e+00> : vector<2x8xf32>
    %61 = tpu.matmul %55, %13, %cst_28 {dimension_numbers = #tpu.dot_dimension_numbers<[1], [0], [0], [1], [0, 0, 1, 1], [], []>} : vector<2x8xf32>, vector<8x8xf32>, vector<2x8xf32> -> vector<2x8xf32>
    %62 = arith.addf %60, %61 : vector<2x8xf32>
    %63 = math.tanh %62 : vector<2x8xf32>
    %64 = vector.extract_strided_slice %63 {offsets = [0, 0], sizes = [1, 8], strides = [1, 1]} : vector<2x8xf32> to vector<1x8xf32>
    %c6 = arith.constant 6 : index
    %c0_29 = arith.constant 0 : index
    %65 = vector.load %arg8[%c6, %c0_29] : memref<16x8xf32, #tpu.memory_space<vmem>>, vector<1x8xf32>
    tpu.vector_store %arg8[%c6, %c0_29], %64 {strides = array<i32>} : memref<16x8xf32, #tpu.memory_space<vmem>>, vector<1x8xf32>,
    %66 = vector.extract_strided_slice %63 {offsets = [1, 0], sizes = [1, 8], strides = [1, 1]} : vector<2x8xf32> to vector<1x8xf32>
    %c14 = arith.constant 14 : index
    %c0_30 = arith.constant 0 : index
    %67 = vector.load %arg8[%c14, %c0_30] : memref<16x8xf32, #tpu.memory_space<vmem>>, vector<1x8xf32>
    tpu.vector_store %arg8[%c14, %c0_30], %66 {strides = array<i32>} : memref<16x8xf32, #tpu.memory_space<vmem>>, vector<1x8xf32>,
    %68 = vector.extract_strided_slice %12 {offsets = [14, 0], sizes = [2, 8], strides = [1, 1]} : vector<16x8xf32> to vector<2x8xf32>
    %cst_31 = arith.constant dense<0.000000e+00> : vector<2x8xf32>
    %69 = tpu.matmul %63, %13, %cst_31 {dimension_numbers = #tpu.dot_dimension_numbers<[1], [0], [0], [1], [0, 0, 1, 1], [], []>} : vector<2x8xf32>, vector<8x8xf32>, vector<2x8xf32> -> vector<2x8xf32>
    %70 = arith.addf %68, %69 : vector<2x8xf32>
    %71 = math.tanh %70 : vector<2x8xf32>
    %72 = vector.extract_strided_slice %71 {offsets = [0, 0], sizes = [1, 8], strides = [1, 1]} : vector<2x8xf32> to vector<1x8xf32>
    %c7 = arith.constant 7 : index
    %c0_32 = arith.constant 0 : index
    %73 = vector.load %arg8[%c7, %c0_32] : memref<16x8xf32, #tpu.memory_space<vmem>>, vector<1x8xf32>
    tpu.vector_store %arg8[%c7, %c0_32], %72 {strides = array<i32>} : memref<16x8xf32, #tpu.memory_space<vmem>>, vector<1x8xf32>,
    %74 = vector.extract_strided_slice %71 {offsets = [1, 0], sizes = [1, 8], strides = [1, 1]} : vector<2x8xf32> to vector<1x8xf32>
    %c15 = arith.constant 15 : index
    %c0_33 = arith.constant 0 : index
    %75 = vector.load %arg8[%c15, %c0_33] : memref<16x8xf32, #tpu.memory_space<vmem>>, vector<1x8xf32>
    tpu.vector_store %arg8[%c15, %c0_33], %74 {strides = array<i32>} : memref<16x8xf32, #tpu.memory_space<vmem>>, vector<1x8xf32>,
    %c0_34 = arith.constant 0 : index
    %c0_35 = arith.constant 0 : index
    %76 = vector.load %arg8[%c0_34, %c0_35] : memref<16x8xf32, #tpu.memory_space<vmem>>, vector<16x8xf32>
    %c0_36 = arith.constant 0 : index
    %c0_37 = arith.constant 0 : index
    %77 = vector.load %arg5[%c0_36, %c0_37] : memref<8x4xf32, #tpu.memory_space<vmem>>, vector<8x4xf32>
    %cst_38 = arith.constant dense<0.000000e+00> : vector<16x4xf32>
    %78 = tpu.matmul %76, %77, %cst_38 {dimension_numbers = #tpu.dot_dimension_numbers<[1], [0], [0], [1], [0, 0, 1, 1], [], []>} : vector<16x8xf32>, vector<8x4xf32>, vector<16x4xf32> -> vector<16x4xf32>
    %c0_39 = arith.constant 0 : index
    %c0_40 = arith.constant 0 : index
    %79 = vector.load %arg6[%c0_39, %c0_40] : memref<1x4xf32, #tpu.memory_space<vmem>>, vector<1x4xf32>
    %80 = vector.broadcast %79 : vector<1x4xf32> to vector<16x4xf32>
    %81 = arith.addf %78, %80 : vector<16x4xf32>
    %c0_41 = arith.constant 0 : index
    %c0_42 = arith.constant 0 : index
    %82 = vector.load %arg7[%c0_41, %c0_42] : memref<16x4xf32, #tpu.memory_space<vmem>>, vector<16x4xf32>
    tpu.vector_store %arg7[%c0_41, %c0_42], %81 {strides = array<i32>} : memref<16x4xf32, #tpu.memory_space<vmem>>, vector<16x4xf32>,
    return
  }
}

</mosaic_0001>

<llo_original>
// kernel: tpu_custom_call.1
$region0: #{tpu_custom_call.1}
  #allocation0 [shape = 'u32[]', space=smem, size = 0x4, offset = 0x4, fixed_abs, tag = 'smem constant byte address 0x4 - core index']
  #allocation1 [shape = 'u32[144,128]{1,0:T(1,128)}', space=vmem, size = 0x12000, scoped, tag = 'internal scratch']
  #allocation2 [shape = 'f32[16,8]{1,0:T(8,128)}', space=vmem, size = 0x2000, scoped, tag = 'scratch operand']
  %s0 = inlined_call_operand.vmem [shape: s32[16,1], index: 0, kind: input, shape index: {}]
  %s1 = inlined_call_operand.vmem [shape: f32[50,10], index: 1, kind: input, shape index: {}]
  %s2 = inlined_call_operand.vmem [shape: f32[10,8], index: 2, kind: input, shape index: {}]
  %s3 = inlined_call_operand.vmem [shape: f32[8,8], index: 3, kind: input, shape index: {}]
  %s4 = inlined_call_operand.vmem [shape: f32[1,8], index: 4, kind: input, shape index: {}]
  %s5 = inlined_call_operand.vmem [shape: f32[8,4], index: 5, kind: input, shape index: {}]
  %s6 = inlined_call_operand.vmem [shape: f32[1,4], index: 6, kind: input, shape index: {}]
  %s7 = inlined_call_operand.vmem [shape: f32[16,4], index: 7, kind: output, shape index: {}]
  %s8 = sld [smem:[#allocation0]]
  $region38: #{tpu_custom_call.1} parent=0
    _
  %s10 = ssub.s32 1, %s8
  %s11 = scalar_select 0, %s10, %s8
  // Predicated region
  $region2: #{tpu_custom_call.1} parent=0 // pred_check
    _
  $region3: #{tpu_custom_call.1} parent=0 // pred_check_branch
    %13 = sbr.rel (0) target = $region5
  $region4: #{tpu_custom_call.1} parent=0 // pred_region
    _
  $region5: #{tpu_custom_call.1} parent=0 // pred_fallthru
    _
  // Predicated region
  $region6: #{tpu_custom_call.1} parent=0 // pred_check
    _
  $region7: #{tpu_custom_call.1} parent=0 // pred_check_branch
    %15 = sbr.rel (0) target = $region9
  $region8: #{tpu_custom_call.1} parent=0 // pred_region
    _
  $region9: #{tpu_custom_call.1} parent=0 // pred_fallthru
    _
  // Predicated region
  $region10: #{tpu_custom_call.1} parent=0 // pred_check
    _
  $region11: #{tpu_custom_call.1} parent=0 // pred_check_branch
    %17 = sbr.rel (0) target = $region13
  $region12: #{tpu_custom_call.1} parent=0 // pred_region
    _
  $region13: #{tpu_custom_call.1} parent=0 // pred_fallthru
    _
  // Predicated region
  $region14: #{tpu_custom_call.1} parent=0 // pred_check
    _
  $region15: #{tpu_custom_call.1} parent=0 // pred_check_branch
    %19 = sbr.rel (0) target = $region17
  $region16: #{tpu_custom_call.1} parent=0 // pred_region
    _
  $region17: #{tpu_custom_call.1} parent=0 // pred_fallthru
    _
  // Predicated region
  $region18: #{tpu_custom_call.1} parent=0 // pred_check
    _
  $region19: #{tpu_custom_call.1} parent=0 // pred_check_branch
    %21 = sbr.rel (0) target = $region21
  $region20: #{tpu_custom_call.1} parent=0 // pred_region
    _
  $region21: #{tpu_custom_call.1} parent=0 // pred_fallthru
    _
  // Predicated region
  $region22: #{tpu_custom_call.1} parent=0 // pred_check
    _
  $region23: #{tpu_custom_call.1} parent=0 // pred_check_branch
    %23 = sbr.rel (0) target = $region25
  $region24: #{tpu_custom_call.1} parent=0 // pred_region
    _
  $region25: #{tpu_custom_call.1} parent=0 // pred_fallthru
    _
  // Predicated region
  $region26: #{tpu_custom_call.1} parent=0 // pred_check
    _
  $region27: #{tpu_custom_call.1} parent=0 // pred_check_branch
    %25 = sbr.rel (0) target = $region29
  $region28: #{tpu_custom_call.1} parent=0 // pred_region
    _
  $region29: #{tpu_custom_call.1} parent=0 // pred_fallthru
    _
  %v26 = vld [vmem:[%s0] sm:$0xff]
  %v27 = vld [vmem:[%s0 + $0x8] sm:$0xff]
  %v28 = vlaneseq
  %v29 = vand.u32 %v28, 127
  %30 = vset.pattern.permute.xlu0 0
  %31 = vperm.xlu0 %30, %v26
  %v32 = vpop.permute.xlu0 %31
  %33 = vset.pattern.permute.xlu0 0
  %34 = vperm.xlu0 %33, %v27
  %v35 = vpop.permute.xlu0 %34
  %vm36 = vcmp.eq.s32.totalorder %v29, %v32
  %vm37 = vcmp.eq.s32.totalorder %v29, %v35
  %v38 = vsel %vm36, 1, 0
  %v39 = vsel %vm37, 1, 0
  %v40 = vcvt.s32.f32 %v38
  %v41 = vcvt.s32.f32 %v39
  %v42 = vld [vmem:[%s1] sm:$0xff]
  %v43 = vld [vmem:[%s1 + $0x8] sm:$0xff]
  %v44 = vld [vmem:[%s1 + $0x10] sm:$0xff]
  %v45 = vld [vmem:[%s1 + $0x18] sm:$0xff]
  %v46 = vld [vmem:[%s1 + $0x20] sm:$0xff]
  %v47 = vld [vmem:[%s1 + $0x28] sm:$0xff]
  %v48 = vld [vmem:[%s1 + $0x30] sm:$0x3]
  %vm49 = vcmask 408576
  %v51 = vsel %vm49, %v40, 0
  %v54 = vsel %vm49, %v41, 0
  %vm56 = vcmask 1041408
  %v58 = vsel %vm56, %v48, 0
  %60 = vmatprep.subr.mxu0 0.0
  %61 = vmatpush1.msra.mxu0 %v42
  %62 = vmatprep.subr.mxu0 0.0
  %63 = vmatpush1.msra.mxu0 %v43
  %64 = vmatprep.subr.mxu0 0.0
  %65 = vmatpush1.msra.mxu0 %v44
  %66 = vmatprep.subr.mxu0 0.0
  %67 = vmatpush1.msra.mxu0 %v45
  %68 = vmatprep.subr.mxu0 0.0
  %69 = vmatpush1.msra.mxu0 %v46
  %70 = vmatprep.subr.mxu0 0.0
  %71 = vmatpush1.msra.mxu0 %v47
  %72 = vmatprep.subr.mxu0 0.0
  %73 = vmatpush1.msra.mxu0 %v58
  %74 = vmatprep.subr.mxu0 0.0
  %75 = vmatpush1.msra.mxu0 0.0
  %76 = vmatprep.subr.mxu0 0.0
  %77 = vmatpush1.msra.mxu0 0.0
  %78 = vmatprep.subr.mxu0 0.0
  %79 = vmatpush1.msra.mxu0 0.0
  %80 = vmatprep.subr.mxu0 0.0
  %81 = vmatpush1.msra.mxu0 0.0
  %82 = vmatprep.subr.mxu0 0.0
  %83 = vmatpush1.msra.mxu0 0.0
  %84 = vmatprep.subr.mxu0 0.0
  %85 = vmatpush1.msra.mxu0 0.0
  %86 = vmatprep.subr.mxu0 0.0
  %87 = vmatpush1.msra.mxu0 0.0
  %88 = vmatprep.subr.mxu0 0.0
  %89 = vmatpush1.msra.mxu0 0.0
  %90 = vmatprep.subr.mxu0 0.0
  %91 = vmatpush1.msra.mxu0 0.0
  %92 = vmatprep.subr.mxu0 0.0
  %93 = vmatpush1.msra.mxu0 0.0
  %94 = vmatprep.subr.mxu0 0.0
  %95 = vmatpush1.msra.mxu0 0.0
  %96 = vmatprep.subr.mxu0 0.0
  %97 = vmatpush1.msra.mxu0 0.0
  %98 = vmatprep.subr.mxu0 0.0
  %99 = vmatpush1.msra.mxu0 0.0
  %100 = vmatprep.subr.mxu0 0.0
  %101 = vmatpush1.msra.mxu0 0.0
  %102 = vmatprep.subr.mxu0 0.0
  %103 = vmatpush1.msra.mxu0 0.0
  %104 = vmatprep.subr.mxu0 0.0
  %105 = vmatpush1.msra.mxu0 0.0
  %106 = vmatprep.subr.mxu0 0.0
  %107 = vmatpush1.msra.mxu0 0.0
  %108 = vmatprep.subr.mxu0 0.0
  %109 = vmatpush1.msra.mxu0 0.0
  %110 = vmatprep.subr.mxu0 0.0
  %111 = vmatpush1.msra.mxu0 0.0
  %112 = vmatprep.subr.mxu0 0.0
  %113 = vmatpush1.msra.mxu0 0.0
  %114 = vmatprep.subr.mxu0 0.0
  %115 = vmatpush1.msra.mxu0 0.0
  %116 = vmatprep.subr.mxu0 0.0
  %117 = vmatpush1.msra.mxu0 0.0
  %118 = vmatprep.subr.mxu0 0.0
  %119 = vmatpush1.msra.mxu0 0.0
  %120 = vmatprep.subr.mxu0 0.0
  %121 = vmatpush1.msra.mxu0 0.0
  %122 = vmatprep.subr.mxu0 0.0
  %123 = vmatpush1.msra.mxu0 0.0
  %124 = vmatprep.mubr.f32.mxu0 0.0
  %125 = vmatmul.mubr.f32.gmra.mrb[0].mxu0 %v51
  %v126 = vpop.f32.mrb[0].mxu0
  %v127 = vadd.f32 0.0, %v126
  %v128 = vpop.f32.mrb[0].mxu0
  %129 = vmatprep.mubr.f32.mxu0 0.0
  %130 = vmatmul.mubr.f32.gmra.mrb[0].mxu0 %v54
  %v131 = vpop.f32.mrb[0].mxu0
  %v132 = vadd.f32 0.0, %v131
  %v133 = vpop.f32.mrb[0].mxu0
  %134 = vdwg.mxu0
  %v135 = vld [vmem:[%s2] sm:$0xff]
  %v136 = vld [vmem:[%s2 + $0x8] sm:$0x3]
  %v137 = vld [vmem:[%s4] sm:$0x1]
  %v139 = vlaneseq
  %v140 = vshrl.u32 %v139, 7
  %v141 = vsub.s32 0, %v140
  %v142 = vrot.slane %v137, %v141
  %vm144 = vcmask 80896
  %v146 = vsel %vm144, %v127, 0
  %v149 = vsel %vm144, %v132, 0
  %v152 = vsel %vm56, %v136, 0
  %154 = vmatprep.subr.mxu0 0.0
  %155 = vmatpush1.msra.mxu0 %v135
  %156 = vmatprep.subr.mxu0 0.0
  %157 = vmatpush1.msra.mxu0 %v152
  %158 = vmatprep.subr.mxu0 0.0
  %159 = vmatpush1.msra.mxu0 0.0
  %160 = vmatprep.subr.mxu0 0.0
  %161 = vmatpush1.msra.mxu0 0.0
  %162 = vmatprep.subr.mxu0 0.0
  %163 = vmatpush1.msra.mxu0 0.0
  %164 = vmatprep.subr.mxu0 0.0
  %165 = vmatpush1.msra.mxu0 0.0
  %166 = vmatprep.subr.mxu0 0.0
  %167 = vmatpush1.msra.mxu0 0.0
  %168 = vmatprep.subr.mxu0 0.0
  %169 = vmatpush1.msra.mxu0 0.0
  %170 = vmatprep.subr.mxu0 0.0
  %171 = vmatpush1.msra.mxu0 0.0
  %172 = vmatprep.subr.mxu0 0.0
  %173 = vmatpush1.msra.mxu0 0.0
  %174 = vmatprep.subr.mxu0 0.0
  %175 = vmatpush1.msra.mxu0 0.0
  %176 = vmatprep.subr.mxu0 0.0
  %177 = vmatpush1.msra.mxu0 0.0
  %178 = vmatprep.subr.mxu0 0.0
  %179 = vmatpush1.msra.mxu0 0.0
  %180 = vmatprep.subr.mxu0 0.0
  %181 = vmatpush1.msra.mxu0 0.0
  %182 = vmatprep.subr.mxu0 0.0
  %183 = vmatpush1.msra.mxu0 0.0
  %184 = vmatprep.subr.mxu0 0.0
  %185 = vmatpush1.msra.mxu0 0.0
  %186 = vmatprep.subr.mxu0 0.0
  %187 = vmatpush1.msra.mxu0 0.0
  %188 = vmatprep.subr.mxu0 0.0
  %189 = vmatpush1.msra.mxu0 0.0
  %190 = vmatprep.subr.mxu0 0.0
  %191 = vmatpush1.msra.mxu0 0.0
  %192 = vmatprep.subr.mxu0 0.0
  %193 = vmatpush1.msra.mxu0 0.0
  %194 = vmatprep.subr.mxu0 0.0
  %195 = vmatpush1.msra.mxu0 0.0
  %196 = vmatprep.subr.mxu0 0.0
  %197 = vmatpush1.msra.mxu0 0.0
  %198 = vmatprep.subr.mxu0 0.0
  %199 = vmatpush1.msra.mxu0 0.0
  %200 = vmatprep.subr.mxu0 0.0
  %201 = vmatpush1.msra.mxu0 0.0
  %202 = vmatprep.subr.mxu0 0.0
  %203 = vmatpush1.msra.mxu0 0.0
  %204 = vmatprep.subr.mxu0 0.0
  %205 = vmatpush1.msra.mxu0 0.0
  %206 = vmatprep.subr.mxu0 0.0
  %207 = vmatpush1.msra.mxu0 0.0
  %208 = vmatprep.subr.mxu0 0.0
  %209 = vmatpush1.msra.mxu0 0.0
  %210 = vmatprep.subr.mxu0 0.0
  %211 = vmatpush1.msra.mxu0 0.0
  %212 = vmatprep.subr.mxu0 0.0
  %213 = vmatpush1.msra.mxu0 0.0
  %214 = vmatprep.subr.mxu0 0.0
  %215 = vmatpush1.msra.mxu0 0.0
  %216 = vmatprep.subr.mxu0 0.0
  %217 = vmatpush1.msra.mxu0 0.0
  %218 = vmatprep.mubr.f32.mxu0 0.0
  %219 = vmatmul.mubr.f32.gmra.mrb[0].mxu0 %v146
  %v220 = vpop.f32.mrb[0].mxu0
  %v221 = vadd.f32 %v142, %v220
  %v222 = vpop.f32.mrb[0].mxu0
  %223 = vmatprep.mubr.f32.mxu0 0.0
  %224 = vmatmul.mubr.f32.gmra.mrb[0].mxu0 %v149
  %v225 = vpop.f32.mrb[0].mxu0
  %v226 = vadd.f32 %v142, %v225
  %v227 = vpop.f32.mrb[0].mxu0
  %228 = vdwg.mxu0
  %v229 = vld [vmem:[%s3] sm:$0xff]
  %v230 = vtanh.pop %v221
  %vm231 = vcmask 57344
  %232 = vst.msk [vmem:[#allocation2] sm:$0x1] %vm231, %v230
  %vm233 = vcmask 58369
  %234 = vst.msk [vmem:[#allocation2 + $0x7] sm:$0x2] %vm233, %v230
  %vm235 = vcmask 64512
  %v237 = vsel %vm235, %v230, 0
  %239 = vmatprep.subr.mxu0 0.0
  %240 = vmatpush1.msra.mxu0 %v229
  %241 = vmatprep.subr.mxu0 0.0
  %242 = vmatpush1.msra.mxu0 0.0
  %243 = vmatprep.subr.mxu0 0.0
  %244 = vmatpush1.msra.mxu0 0.0
  %245 = vmatprep.subr.mxu0 0.0
  %246 = vmatpush1.msra.mxu0 0.0
  %247 = vmatprep.subr.mxu0 0.0
  %248 = vmatpush1.msra.mxu0 0.0
  %249 = vmatprep.subr.mxu0 0.0
  %250 = vmatpush1.msra.mxu0 0.0
  %251 = vmatprep.subr.mxu0 0.0
  %252 = vmatpush1.msra.mxu0 0.0
  %253 = vmatprep.subr.mxu0 0.0
  %254 = vmatpush1.msra.mxu0 0.0
  %255 = vmatprep.subr.mxu0 0.0
  %256 = vmatpush1.msra.mxu0 0.0
  %257 = vmatprep.subr.mxu0 0.0
  %258 = vmatpush1.msra.mxu0 0.0
  %259 = vmatprep.subr.mxu0 0.0
  %260 = vmatpush1.msra.mxu0 0.0
  %261 = vmatprep.subr.mxu0 0.0
  %262 = vmatpush1.msra.mxu0 0.0
  %263 = vmatprep.subr.mxu0 0.0
  %264 = vmatpush1.msra.mxu0 0.0
  %265 = vmatprep.subr.mxu0 0.0
  %266 = vmatpush1.msra.mxu0 0.0
  %267 = vmatprep.subr.mxu0 0.0
  %268 = vmatpush1.msra.mxu0 0.0
  %269 = vmatprep.subr.mxu0 0.0
  %270 = vmatpush1.msra.mxu0 0.0
  %271 = vmatprep.subr.mxu0 0.0
  %272 = vmatpush1.msra.mxu0 0.0
  %273 = vmatprep.subr.mxu0 0.0
  %274 = vmatpush1.msra.mxu0 0.0
  %275 = vmatprep.subr.mxu0 0.0
  %276 = vmatpush1.msra.mxu0 0.0
  %277 = vmatprep.subr.mxu0 0.0
  %278 = vmatpush1.msra.mxu0 0.0
  %279 = vmatprep.subr.mxu0 0.0
  %280 = vmatpush1.msra.mxu0 0.0
  %281 = vmatprep.subr.mxu0 0.0
  %282 = vmatpush1.msra.mxu0 0.0
  %283 = vmatprep.subr.mxu0 0.0
  %284 = vmatpush1.msra.mxu0 0.0
  %285 = vmatprep.subr.mxu0 0.0
  %286 = vmatpush1.msra.mxu0 0.0
  %287 = vmatprep.subr.mxu0 0.0
  %288 = vmatpush1.msra.mxu0 0.0
  %289 = vmatprep.subr.mxu0 0.0
  %290 = vmatpush1.msra.mxu0 0.0
  %291 = vmatprep.subr.mxu0 0.0
  %292 = vmatpush1.msra.mxu0 0.0
  %293 = vmatprep.subr.mxu0 0.0
  %294 = vmatpush1.msra.mxu0 0.0
  %295 = vmatprep.subr.mxu0 0.0
  %296 = vmatpush1.msra.mxu0 0.0
  %297 = vmatprep.subr.mxu0 0.0
  %298 = vmatpush1.msra.mxu0 0.0
  %299 = vmatprep.subr.mxu0 0.0
  %300 = vmatpush1.msra.mxu0 0.0
  %301 = vmatprep.subr.mxu0 0.0
  %302 = vmatpush1.msra.mxu0 0.0
  %303 = vmatprep.mubr.f32.mxu0 0.0
  %304 = vmatmul.mubr.f32.gmra.mrb[0].mxu0 %v237
  %v305 = vpop.f32.mrb[0].mxu0
  %v306 = vadd.f32 0.0, %v305
  %v307 = vpop.f32.mrb[0].mxu0
  %308 = vdwg.mxu0
  %v310 = vrot.slane %v306, 6
  %v312 = vadd.f32 %v221, %v310
  %v313 = vtanh.pop %v312
  %vm314 = vcmask 59394
  %315 = vst.msk [vmem:[#allocation2 - $0x1] sm:$0x4] %vm314, %v313
  %vm316 = vcmask 60419
  %317 = vst.msk [vmem:[#allocation2 + $0x6] sm:$0x8] %vm316, %v313
  %v319 = vrot.slane %v313, 2
  %v320 = vsel %vm235, %v319, 0
  %322 = vmatprep.subr.mxu0 0.0
  %323 = vmatpush1.msra.mxu0 %v229
  %324 = vmatprep.subr.mxu0 0.0
  %325 = vmatpush1.msra.mxu0 0.0
  %326 = vmatprep.subr.mxu0 0.0
  %327 = vmatpush1.msra.mxu0 0.0
  %328 = vmatprep.subr.mxu0 0.0
  %329 = vmatpush1.msra.mxu0 0.0
  %330 = vmatprep.subr.mxu0 0.0
  %331 = vmatpush1.msra.mxu0 0.0
  %332 = vmatprep.subr.mxu0 0.0
  %333 = vmatpush1.msra.mxu0 0.0
  %334 = vmatprep.subr.mxu0 0.0
  %335 = vmatpush1.msra.mxu0 0.0
  %336 = vmatprep.subr.mxu0 0.0
  %337 = vmatpush1.msra.mxu0 0.0
  %338 = vmatprep.subr.mxu0 0.0
  %339 = vmatpush1.msra.mxu0 0.0
  %340 = vmatprep.subr.mxu0 0.0
  %341 = vmatpush1.msra.mxu0 0.0
  %342 = vmatprep.subr.mxu0 0.0
  %343 = vmatpush1.msra.mxu0 0.0
  %344 = vmatprep.subr.mxu0 0.0
  %345 = vmatpush1.msra.mxu0 0.0
  %346 = vmatprep.subr.mxu0 0.0
  %347 = vmatpush1.msra.mxu0 0.0
  %348 = vmatprep.subr.mxu0 0.0
  %349 = vmatpush1.msra.mxu0 0.0
  %350 = vmatprep.subr.mxu0 0.0
  %351 = vmatpush1.msra.mxu0 0.0
  %352 = vmatprep.subr.mxu0 0.0
  %353 = vmatpush1.msra.mxu0 0.0
  %354 = vmatprep.subr.mxu0 0.0
  %355 = vmatpush1.msra.mxu0 0.0
  %356 = vmatprep.subr.mxu0 0.0
  %357 = vmatpush1.msra.mxu0 0.0
  %358 = vmatprep.subr.mxu0 0.0
  %359 = vmatpush1.msra.mxu0 0.0
  %360 = vmatprep.subr.mxu0 0.0
  %361 = vmatpush1.msra.mxu0 0.0
  %362 = vmatprep.subr.mxu0 0.0
  %363 = vmatpush1.msra.mxu0 0.0
  %364 = vmatprep.subr.mxu0 0.0
  %365 = vmatpush1.msra.mxu0 0.0
  %366 = vmatprep.subr.mxu0 0.0
  %367 = vmatpush1.msra.mxu0 0.0
  %368 = vmatprep.subr.mxu0 0.0
  %369 = vmatpush1.msra.mxu0 0.0
  %370 = vmatprep.subr.mxu0 0.0
  %371 = vmatpush1.msra.mxu0 0.0
  %372 = vmatprep.subr.mxu0 0.0
  %373 = vmatpush1.msra.mxu0 0.0
  %374 = vmatprep.subr.mxu0 0.0
  %375 = vmatpush1.msra.mxu0 0.0
  %376 = vmatprep.subr.mxu0 0.0
  %377 = vmatpush1.msra.mxu0 0.0
  %378 = vmatprep.subr.mxu0 0.0
  %379 = vmatpush1.msra.mxu0 0.0
  %380 = vmatprep.subr.mxu0 0.0
  %381 = vmatpush1.msra.mxu0 0.0
  %382 = vmatprep.subr.mxu0 0.0
  %383 = vmatpush1.msra.mxu0 0.0
  %384 = vmatprep.subr.mxu0 0.0
  %385 = vmatpush1.msra.mxu0 0.0
  %386 = vmatprep.mubr.f32.mxu0 0.0
  %387 = vmatmul.mubr.f32.gmra.mrb[0].mxu0 %v320
  %v388 = vpop.f32.mrb[0].mxu0
  %v389 = vadd.f32 0.0, %v388
  %v390 = vpop.f32.mrb[0].mxu0
  %391 = vdwg.mxu0
  %v393 = vrot.slane %v389, 4
  %v395 = vadd.f32 %v221, %v393
  %v396 = vtanh.pop %v395
  %vm397 = vcmask 61444
  %398 = vst.msk [vmem:[#allocation2 - $0x2] sm:$0x10] %vm397, %v396
  %vm399 = vcmask 62469
  %400 = vst.msk [vmem:[#allocation2 + $0x5] sm:$0x20] %vm399, %v396
  %v402 = vrot.slane %v396, 4
  %v403 = vsel %vm235, %v402, 0
  %405 = vmatprep.subr.mxu0 0.0
  %406 = vmatpush1.msra.mxu0 %v229
  %407 = vmatprep.subr.mxu0 0.0
  %408 = vmatpush1.msra.mxu0 0.0
  %409 = vmatprep.subr.mxu0 0.0
  %410 = vmatpush1.msra.mxu0 0.0
  %411 = vmatprep.subr.mxu0 0.0
  %412 = vmatpush1.msra.mxu0 0.0
  %413 = vmatprep.subr.mxu0 0.0
  %414 = vmatpush1.msra.mxu0 0.0
  %415 = vmatprep.subr.mxu0 0.0
  %416 = vmatpush1.msra.mxu0 0.0
  %417 = vmatprep.subr.mxu0 0.0
  %418 = vmatpush1.msra.mxu0 0.0
  %419 = vmatprep.subr.mxu0 0.0
  %420 = vmatpush1.msra.mxu0 0.0
  %421 = vmatprep.subr.mxu0 0.0
  %422 = vmatpush1.msra.mxu0 0.0
  %423 = vmatprep.subr.mxu0 0.0
  %424 = vmatpush1.msra.mxu0 0.0
  %425 = vmatprep.subr.mxu0 0.0
  %426 = vmatpush1.msra.mxu0 0.0
  %427 = vmatprep.subr.mxu0 0.0
  %428 = vmatpush1.msra.mxu0 0.0
  %429 = vmatprep.subr.mxu0 0.0
  %430 = vmatpush1.msra.mxu0 0.0
  %431 = vmatprep.subr.mxu0 0.0
  %432 = vmatpush1.msra.mxu0 0.0
  %433 = vmatprep.subr.mxu0 0.0
  %434 = vmatpush1.msra.mxu0 0.0
  %435 = vmatprep.subr.mxu0 0.0
  %436 = vmatpush1.msra.mxu0 0.0
  %437 = vmatprep.subr.mxu0 0.0
  %438 = vmatpush1.msra.mxu0 0.0
  %439 = vmatprep.subr.mxu0 0.0
  %440 = vmatpush1.msra.mxu0 0.0
  %441 = vmatprep.subr.mxu0 0.0
  %442 = vmatpush1.msra.mxu0 0.0
  %443 = vmatprep.subr.mxu0 0.0
  %444 = vmatpush1.msra.mxu0 0.0
  %445 = vmatprep.subr.mxu0 0.0
  %446 = vmatpush1.msra.mxu0 0.0
  %447 = vmatprep.subr.mxu0 0.0
  %448 = vmatpush1.msra.mxu0 0.0
  %449 = vmatprep.subr.mxu0 0.0
  %450 = vmatpush1.msra.mxu0 0.0
  %451 = vmatprep.subr.mxu0 0.0
  %452 = vmatpush1.msra.mxu0 0.0
  %453 = vmatprep.subr.mxu0 0.0
  %454 = vmatpush1.msra.mxu0 0.0
  %455 = vmatprep.subr.mxu0 0.0
  %456 = vmatpush1.msra.mxu0 0.0
  %457 = vmatprep.subr.mxu0 0.0
  %458 = vmatpush1.msra.mxu0 0.0
  %459 = vmatprep.subr.mxu0 0.0
  %460 = vmatpush1.msra.mxu0 0.0
  %461 = vmatprep.subr.mxu0 0.0
  %462 = vmatpush1.msra.mxu0 0.0
  %463 = vmatprep.subr.mxu0 0.0
  %464 = vmatpush1.msra.mxu0 0.0
  %465 = vmatprep.subr.mxu0 0.0
  %466 = vmatpush1.msra.mxu0 0.0
  %467 = vmatprep.subr.mxu0 0.0
  %468 = vmatpush1.msra.mxu0 0.0
  %469 = vmatprep.mubr.f32.mxu0 0.0
  %470 = vmatmul.mubr.f32.gmra.mrb[0].mxu0 %v403
  %v471 = vpop.f32.mrb[0].mxu0
  %v472 = vadd.f32 0.0, %v471
  %v473 = vpop.f32.mrb[0].mxu0
  %474 = vdwg.mxu0
  %v476 = vrot.slane %v472, 2
  %v478 = vadd.f32 %v221, %v476
  %v479 = vtanh.pop %v478
  %vm480 = vcmask 63494
  %481 = vst.msk [vmem:[#allocation2 - $0x3] sm:$0x40] %vm480, %v479
  %vm482 = vcmask 64519
  %483 = vst.msk [vmem:[#allocation2 + $0x4] sm:$0x80] %vm482, %v479
  %v485 = vrot.slane %v479, 6
  %v486 = vsel %vm235, %v485, 0
  %488 = vmatprep.subr.mxu0 0.0
  %489 = vmatpush1.msra.mxu0 %v229
  %490 = vmatprep.subr.mxu0 0.0
  %491 = vmatpush1.msra.mxu0 0.0
  %492 = vmatprep.subr.mxu0 0.0
  %493 = vmatpush1.msra.mxu0 0.0
  %494 = vmatprep.subr.mxu0 0.0
  %495 = vmatpush1.msra.mxu0 0.0
  %496 = vmatprep.subr.mxu0 0.0
  %497 = vmatpush1.msra.mxu0 0.0
  %498 = vmatprep.subr.mxu0 0.0
  %499 = vmatpush1.msra.mxu0 0.0
  %500 = vmatprep.subr.mxu0 0.0
  %501 = vmatpush1.msra.mxu0 0.0
  %502 = vmatprep.subr.mxu0 0.0
  %503 = vmatpush1.msra.mxu0 0.0
  %504 = vmatprep.subr.mxu0 0.0
  %505 = vmatpush1.msra.mxu0 0.0
  %506 = vmatprep.subr.mxu0 0.0
  %507 = vmatpush1.msra.mxu0 0.0
  %508 = vmatprep.subr.mxu0 0.0
  %509 = vmatpush1.msra.mxu0 0.0
  %510 = vmatprep.subr.mxu0 0.0
  %511 = vmatpush1.msra.mxu0 0.0
  %512 = vmatprep.subr.mxu0 0.0
  %513 = vmatpush1.msra.mxu0 0.0
  %514 = vmatprep.subr.mxu0 0.0
  %515 = vmatpush1.msra.mxu0 0.0
  %516 = vmatprep.subr.mxu0 0.0
  %517 = vmatpush1.msra.mxu0 0.0
  %518 = vmatprep.subr.mxu0 0.0
  %519 = vmatpush1.msra.mxu0 0.0
  %520 = vmatprep.subr.mxu0 0.0
  %521 = vmatpush1.msra.mxu0 0.0
  %522 = vmatprep.subr.mxu0 0.0
  %523 = vmatpush1.msra.mxu0 0.0
  %524 = vmatprep.subr.mxu0 0.0
  %525 = vmatpush1.msra.mxu0 0.0
  %526 = vmatprep.subr.mxu0 0.0
  %527 = vmatpush1.msra.mxu0 0.0
  %528 = vmatprep.subr.mxu0 0.0
  %529 = vmatpush1.msra.mxu0 0.0
  %530 = vmatprep.subr.mxu0 0.0
  %531 = vmatpush1.msra.mxu0 0.0
  %532 = vmatprep.subr.mxu0 0.0
  %533 = vmatpush1.msra.mxu0 0.0
  %534 = vmatprep.subr.mxu0 0.0
  %535 = vmatpush1.msra.mxu0 0.0
  %536 = vmatprep.subr.mxu0 0.0
  %537 = vmatpush1.msra.mxu0 0.0
  %538 = vmatprep.subr.mxu0 0.0
  %539 = vmatpush1.msra.mxu0 0.0
  %540 = vmatprep.subr.mxu0 0.0
  %541 = vmatpush1.msra.mxu0 0.0
  %542 = vmatprep.subr.mxu0 0.0
  %543 = vmatpush1.msra.mxu0 0.0
  %544 = vmatprep.subr.mxu0 0.0
  %545 = vmatpush1.msra.mxu0 0.0
  %546 = vmatprep.subr.mxu0 0.0
  %547 = vmatpush1.msra.mxu0 0.0
  %548 = vmatprep.subr.mxu0 0.0
  %549 = vmatpush1.msra.mxu0 0.0
  %550 = vmatprep.subr.mxu0 0.0
  %551 = vmatpush1.msra.mxu0 0.0
  %552 = vmatprep.mubr.f32.mxu0 0.0
  %553 = vmatmul.mubr.f32.gmra.mrb[0].mxu0 %v486
  %v554 = vpop.f32.mrb[0].mxu0
  %v555 = vadd.f32 0.0, %v554
  %v556 = vpop.f32.mrb[0].mxu0
  %557 = vdwg.mxu0
  %v558 = vadd.f32 %v226, %v555
  %v559 = vtanh.pop %v558
  %560 = vst.msk [vmem:[#allocation2 + $0x4] sm:$0x1] %vm231, %v559
  %561 = vst.msk [vmem:[#allocation2 + $0xb] sm:$0x2] %vm233, %v559
  %v563 = vsel %vm235, %v559, 0
  %565 = vmatprep.subr.mxu0 0.0
  %566 = vmatpush1.msra.mxu0 %v229
  %567 = vmatprep.subr.mxu0 0.0
  %568 = vmatpush1.msra.mxu0 0.0
  %569 = vmatprep.subr.mxu0 0.0
  %570 = vmatpush1.msra.mxu0 0.0
  %571 = vmatprep.subr.mxu0 0.0
  %572 = vmatpush1.msra.mxu0 0.0
  %573 = vmatprep.subr.mxu0 0.0
  %574 = vmatpush1.msra.mxu0 0.0
  %575 = vmatprep.subr.mxu0 0.0
  %576 = vmatpush1.msra.mxu0 0.0
  %577 = vmatprep.subr.mxu0 0.0
  %578 = vmatpush1.msra.mxu0 0.0
  %579 = vmatprep.subr.mxu0 0.0
  %580 = vmatpush1.msra.mxu0 0.0
  %581 = vmatprep.subr.mxu0 0.0
  %582 = vmatpush1.msra.mxu0 0.0
  %583 = vmatprep.subr.mxu0 0.0
  %584 = vmatpush1.msra.mxu0 0.0
  %585 = vmatprep.subr.mxu0 0.0
  %586 = vmatpush1.msra.mxu0 0.0
  %587 = vmatprep.subr.mxu0 0.0
  %588 = vmatpush1.msra.mxu0 0.0
  %589 = vmatprep.subr.mxu0 0.0
  %590 = vmatpush1.msra.mxu0 0.0
  %591 = vmatprep.subr.mxu0 0.0
  %592 = vmatpush1.msra.mxu0 0.0
  %593 = vmatprep.subr.mxu0 0.0
  %594 = vmatpush1.msra.mxu0 0.0
  %595 = vmatprep.subr.mxu0 0.0
  %596 = vmatpush1.msra.mxu0 0.0
  %597 = vmatprep.subr.mxu0 0.0
  %598 = vmatpush1.msra.mxu0 0.0
  %599 = vmatprep.subr.mxu0 0.0
  %600 = vmatpush1.msra.mxu0 0.0
  %601 = vmatprep.subr.mxu0 0.0
  %602 = vmatpush1.msra.mxu0 0.0
  %603 = vmatprep.subr.mxu0 0.0
  %604 = vmatpush1.msra.mxu0 0.0
  %605 = vmatprep.subr.mxu0 0.0
  %606 = vmatpush1.msra.mxu0 0.0
  %607 = vmatprep.subr.mxu0 0.0
  %608 = vmatpush1.msra.mxu0 0.0
  %609 = vmatprep.subr.mxu0 0.0
  %610 = vmatpush1.msra.mxu0 0.0
  %611 = vmatprep.subr.mxu0 0.0
  %612 = vmatpush1.msra.mxu0 0.0
  %613 = vmatprep.subr.mxu0 0.0
  %614 = vmatpush1.msra.mxu0 0.0
  %615 = vmatprep.subr.mxu0 0.0
  %616 = vmatpush1.msra.mxu0 0.0
  %617 = vmatprep.subr.mxu0 0.0
  %618 = vmatpush1.msra.mxu0 0.0
  %619 = vmatprep.subr.mxu0 0.0
  %620 = vmatpush1.msra.mxu0 0.0
  %621 = vmatprep.subr.mxu0 0.0
  %622 = vmatpush1.msra.mxu0 0.0
  %623 = vmatprep.subr.mxu0 0.0
  %624 = vmatpush1.msra.mxu0 0.0
  %625 = vmatprep.subr.mxu0 0.0
  %626 = vmatpush1.msra.mxu0 0.0
  %627 = vmatprep.subr.mxu0 0.0
  %628 = vmatpush1.msra.mxu0 0.0
  %629 = vmatprep.mubr.f32.mxu0 0.0
  %630 = vmatmul.mubr.f32.gmra.mrb[0].mxu0 %v563
  %v631 = vpop.f32.mrb[0].mxu0
  %v632 = vadd.f32 0.0, %v631
  %v633 = vpop.f32.mrb[0].mxu0
  %634 = vdwg.mxu0
  %v636 = vrot.slane %v632, 6
  %v638 = vadd.f32 %v226, %v636
  %v639 = vtanh.pop %v638
  %640 = vst.msk [vmem:[#allocation2 + $0x3] sm:$0x4] %vm314, %v639
  %641 = vst.msk [vmem:[#allocation2 + $0xa] sm:$0x8] %vm316, %v639
  %v643 = vrot.slane %v639, 2
  %v644 = vsel %vm235, %v643, 0
  %646 = vmatprep.subr.mxu0 0.0
  %647 = vmatpush1.msra.mxu0 %v229
  %648 = vmatprep.subr.mxu0 0.0
  %649 = vmatpush1.msra.mxu0 0.0
  %650 = vmatprep.subr.mxu0 0.0
  %651 = vmatpush1.msra.mxu0 0.0
  %652 = vmatprep.subr.mxu0 0.0
  %653 = vmatpush1.msra.mxu0 0.0
  %654 = vmatprep.subr.mxu0 0.0
  %655 = vmatpush1.msra.mxu0 0.0
  %656 = vmatprep.subr.mxu0 0.0
  %657 = vmatpush1.msra.mxu0 0.0
  %658 = vmatprep.subr.mxu0 0.0
  %659 = vmatpush1.msra.mxu0 0.0
  %660 = vmatprep.subr.mxu0 0.0
  %661 = vmatpush1.msra.mxu0 0.0
  %662 = vmatprep.subr.mxu0 0.0
  %663 = vmatpush1.msra.mxu0 0.0
  %664 = vmatprep.subr.mxu0 0.0
  %665 = vmatpush1.msra.mxu0 0.0
  %666 = vmatprep.subr.mxu0 0.0
  %667 = vmatpush1.msra.mxu0 0.0
  %668 = vmatprep.subr.mxu0 0.0
  %669 = vmatpush1.msra.mxu0 0.0
  %670 = vmatprep.subr.mxu0 0.0
  %671 = vmatpush1.msra.mxu0 0.0
  %672 = vmatprep.subr.mxu0 0.0
  %673 = vmatpush1.msra.mxu0 0.0
  %674 = vmatprep.subr.mxu0 0.0
  %675 = vmatpush1.msra.mxu0 0.0
  %676 = vmatprep.subr.mxu0 0.0
  %677 = vmatpush1.msra.mxu0 0.0
  %678 = vmatprep.subr.mxu0 0.0
  %679 = vmatpush1.msra.mxu0 0.0
  %680 = vmatprep.subr.mxu0 0.0
  %681 = vmatpush1.msra.mxu0 0.0
  %682 = vmatprep.subr.mxu0 0.0
  %683 = vmatpush1.msra.mxu0 0.0
  %684 = vmatprep.subr.mxu0 0.0
  %685 = vmatpush1.msra.mxu0 0.0
  %686 = vmatprep.subr.mxu0 0.0
  %687 = vmatpush1.msra.mxu0 0.0
  %688 = vmatprep.subr.mxu0 0.0
  %689 = vmatpush1.msra.mxu0 0.0
  %690 = vmatprep.subr.mxu0 0.0
  %691 = vmatpush1.msra.mxu0 0.0
  %692 = vmatprep.subr.mxu0 0.0
  %693 = vmatpush1.msra.mxu0 0.0
  %694 = vmatprep.subr.mxu0 0.0
  %695 = vmatpush1.msra.mxu0 0.0
  %696 = vmatprep.subr.mxu0 0.0
  %697 = vmatpush1.msra.mxu0 0.0
  %698 = vmatprep.subr.mxu0 0.0
  %699 = vmatpush1.msra.mxu0 0.0
  %700 = vmatprep.subr.mxu0 0.0
  %701 = vmatpush1.msra.mxu0 0.0
  %702 = vmatprep.subr.mxu0 0.0
  %703 = vmatpush1.msra.mxu0 0.0
  %704 = vmatprep.subr.mxu0 0.0
  %705 = vmatpush1.msra.mxu0 0.0
  %706 = vmatprep.subr.mxu0 0.0
  %707 = vmatpush1.msra.mxu0 0.0
  %708 = vmatprep.subr.mxu0 0.0
  %709 = vmatpush1.msra.mxu0 0.0
  %710 = vmatprep.mubr.f32.mxu0 0.0
  %711 = vmatmul.mubr.f32.gmra.mrb[0].mxu0 %v644
  %v712 = vpop.f32.mrb[0].mxu0
  %v713 = vadd.f32 0.0, %v712
  %v714 = vpop.f32.mrb[0].mxu0
  %715 = vdwg.mxu0
  %v717 = vrot.slane %v713, 4
  %v719 = vadd.f32 %v226, %v717
  %v720 = vtanh.pop %v719
  %721 = vst.msk [vmem:[#allocation2 + $0x2] sm:$0x10] %vm397, %v720
  %722 = vst.msk [vmem:[#allocation2 + $0x9] sm:$0x20] %vm399, %v720
  %v724 = vrot.slane %v720, 4
  %v725 = vsel %vm235, %v724, 0
  %727 = vmatprep.subr.mxu0 0.0
  %728 = vmatpush1.msra.mxu0 %v229
  %729 = vmatprep.subr.mxu0 0.0
  %730 = vmatpush1.msra.mxu0 0.0
  %731 = vmatprep.subr.mxu0 0.0
  %732 = vmatpush1.msra.mxu0 0.0
  %733 = vmatprep.subr.mxu0 0.0
  %734 = vmatpush1.msra.mxu0 0.0
  %735 = vmatprep.subr.mxu0 0.0
  %736 = vmatpush1.msra.mxu0 0.0
  %737 = vmatprep.subr.mxu0 0.0
  %738 = vmatpush1.msra.mxu0 0.0
  %739 = vmatprep.subr.mxu0 0.0
  %740 = vmatpush1.msra.mxu0 0.0
  %741 = vmatprep.subr.mxu0 0.0
  %742 = vmatpush1.msra.mxu0 0.0
  %743 = vmatprep.subr.mxu0 0.0
  %744 = vmatpush1.msra.mxu0 0.0
  %745 = vmatprep.subr.mxu0 0.0
  %746 = vmatpush1.msra.mxu0 0.0
  %747 = vmatprep.subr.mxu0 0.0
  %748 = vmatpush1.msra.mxu0 0.0
  %749 = vmatprep.subr.mxu0 0.0
  %750 = vmatpush1.msra.mxu0 0.0
  %751 = vmatprep.subr.mxu0 0.0
  %752 = vmatpush1.msra.mxu0 0.0
  %753 = vmatprep.subr.mxu0 0.0
  %754 = vmatpush1.msra.mxu0 0.0
  %755 = vmatprep.subr.mxu0 0.0
  %756 = vmatpush1.msra.mxu0 0.0
  %757 = vmatprep.subr.mxu0 0.0
  %758 = vmatpush1.msra.mxu0 0.0
  %759 = vmatprep.subr.mxu0 0.0
  %760 = vmatpush1.msra.mxu0 0.0
  %761 = vmatprep.subr.mxu0 0.0
  %762 = vmatpush1.msra.mxu0 0.0
  %763 = vmatprep.subr.mxu0 0.0
  %764 = vmatpush1.msra.mxu0 0.0
  %765 = vmatprep.subr.mxu0 0.0
  %766 = vmatpush1.msra.mxu0 0.0
  %767 = vmatprep.subr.mxu0 0.0
  %768 = vmatpush1.msra.mxu0 0.0
  %769 = vmatprep.subr.mxu0 0.0
  %770 = vmatpush1.msra.mxu0 0.0
  %771 = vmatprep.subr.mxu0 0.0
  %772 = vmatpush1.msra.mxu0 0.0
  %773 = vmatprep.subr.mxu0 0.0
  %774 = vmatpush1.msra.mxu0 0.0
  %775 = vmatprep.subr.mxu0 0.0
  %776 = vmatpush1.msra.mxu0 0.0
  %777 = vmatprep.subr.mxu0 0.0
  %778 = vmatpush1.msra.mxu0 0.0
  %779 = vmatprep.subr.mxu0 0.0
  %780 = vmatpush1.msra.mxu0 0.0
  %781 = vmatprep.subr.mxu0 0.0
  %782 = vmatpush1.msra.mxu0 0.0
  %783 = vmatprep.subr.mxu0 0.0
  %784 = vmatpush1.msra.mxu0 0.0
  %785 = vmatprep.subr.mxu0 0.0
  %786 = vmatpush1.msra.mxu0 0.0
  %787 = vmatprep.subr.mxu0 0.0
  %788 = vmatpush1.msra.mxu0 0.0
  %789 = vmatprep.subr.mxu0 0.0
  %790 = vmatpush1.msra.mxu0 0.0
  %791 = vmatprep.mubr.f32.mxu0 0.0
  %792 = vmatmul.mubr.f32.gmra.mrb[0].mxu0 %v725
  %v793 = vpop.f32.mrb[0].mxu0
  %v794 = vadd.f32 0.0, %v793
  %v795 = vpop.f32.mrb[0].mxu0
  %796 = vdwg.mxu0
  %v798 = vrot.slane %v794, 2
  %v800 = vadd.f32 %v226, %v798
  %v801 = vtanh.pop %v800
  %802 = vst.msk [vmem:[#allocation2 + $0x1] sm:$0x40] %vm480, %v801
  %803 = vst.msk [vmem:[#allocation2 + $0x8] sm:$0x80] %vm482, %v801
  %v804 = vld [vmem:[#allocation2] sm:$0xff]
  %v805 = vld [vmem:[#allocation2 + $0x8] sm:$0xff]
  %v806 = vld [vmem:[%s5] sm:$0xff]
  %v807 = vld [vmem:[%s6] sm:$0x1]
  %v809 = vlaneseq
  %v810 = vshrl.u32 %v809, 7
  %v811 = vsub.s32 0, %v810
  %v812 = vrot.slane %v807, %v811
  %v815 = vsel %vm235, %v804, 0
  %v818 = vsel %vm235, %v805, 0
  %820 = vmatprep.subr.mxu0 0.0
  %821 = vmatpush1.msra.mxu0 %v806
  %822 = vmatprep.subr.mxu0 0.0
  %823 = vmatpush1.msra.mxu0 0.0
  %824 = vmatprep.subr.mxu0 0.0
  %825 = vmatpush1.msra.mxu0 0.0
  %826 = vmatprep.subr.mxu0 0.0
  %827 = vmatpush1.msra.mxu0 0.0
  %828 = vmatprep.subr.mxu0 0.0
  %829 = vmatpush1.msra.mxu0 0.0
  %830 = vmatprep.subr.mxu0 0.0
  %831 = vmatpush1.msra.mxu0 0.0
  %832 = vmatprep.subr.mxu0 0.0
  %833 = vmatpush1.msra.mxu0 0.0
  %834 = vmatprep.subr.mxu0 0.0
  %835 = vmatpush1.msra.mxu0 0.0
  %836 = vmatprep.subr.mxu0 0.0
  %837 = vmatpush1.msra.mxu0 0.0
  %838 = vmatprep.subr.mxu0 0.0
  %839 = vmatpush1.msra.mxu0 0.0
  %840 = vmatprep.subr.mxu0 0.0
  %841 = vmatpush1.msra.mxu0 0.0
  %842 = vmatprep.subr.mxu0 0.0
  %843 = vmatpush1.msra.mxu0 0.0
  %844 = vmatprep.subr.mxu0 0.0
  %845 = vmatpush1.msra.mxu0 0.0
  %846 = vmatprep.subr.mxu0 0.0
  %847 = vmatpush1.msra.mxu0 0.0
  %848 = vmatprep.subr.mxu0 0.0
  %849 = vmatpush1.msra.mxu0 0.0
  %850 = vmatprep.subr.mxu0 0.0
  %851 = vmatpush1.msra.mxu0 0.0
  %852 = vmatprep.subr.mxu0 0.0
  %853 = vmatpush1.msra.mxu0 0.0
  %854 = vmatprep.subr.mxu0 0.0
  %855 = vmatpush1.msra.mxu0 0.0
  %856 = vmatprep.subr.mxu0 0.0
  %857 = vmatpush1.msra.mxu0 0.0
  %858 = vmatprep.subr.mxu0 0.0
  %859 = vmatpush1.msra.mxu0 0.0
  %860 = vmatprep.subr.mxu0 0.0
  %861 = vmatpush1.msra.mxu0 0.0
  %862 = vmatprep.subr.mxu0 0.0
  %863 = vmatpush1.msra.mxu0 0.0
  %864 = vmatprep.subr.mxu0 0.0
  %865 = vmatpush1.msra.mxu0 0.0
  %866 = vmatprep.subr.mxu0 0.0
  %867 = vmatpush1.msra.mxu0 0.0
  %868 = vmatprep.subr.mxu0 0.0
  %869 = vmatpush1.msra.mxu0 0.0
  %870 = vmatprep.subr.mxu0 0.0
  %871 = vmatpush1.msra.mxu0 0.0
  %872 = vmatprep.subr.mxu0 0.0
  %873 = vmatpush1.msra.mxu0 0.0
  %874 = vmatprep.subr.mxu0 0.0
  %875 = vmatpush1.msra.mxu0 0.0
  %876 = vmatprep.subr.mxu0 0.0
  %877 = vmatpush1.msra.mxu0 0.0
  %878 = vmatprep.subr.mxu0 0.0
  %879 = vmatpush1.msra.mxu0 0.0
  %880 = vmatprep.subr.mxu0 0.0
  %881 = vmatpush1.msra.mxu0 0.0
  %882 = vmatprep.subr.mxu0 0.0
  %883 = vmatpush1.msra.mxu0 0.0
  %884 = vmatprep.mubr.f32.mxu0 0.0
  %885 = vmatmul.mubr.f32.gmra.mrb[0].mxu0 %v815
  %v886 = vpop.f32.mrb[0].mxu0
  %v887 = vadd.f32 %v812, %v886
  %v888 = vpop.f32.mrb[0].mxu0
  %889 = vmatprep.mubr.f32.mxu0 0.0
  %890 = vmatmul.mubr.f32.gmra.mrb[0].mxu0 %v818
  %v891 = vpop.f32.mrb[0].mxu0
  %v892 = vadd.f32 %v812, %v891
  %v893 = vpop.f32.mrb[0].mxu0
  %894 = vdwg.mxu0
  %vm895 = vcmask 31744
  %896 = vst.msk [vmem:[%s7] sm:$0xff] %vm895, %v887
  %897 = vst.msk [vmem:[%s7 + $0x8] sm:$0xff] %vm895, %v892
  // Predicated region
  $region30: #{tpu_custom_call.1} parent=0 // pred_check
    _
  $region31: #{tpu_custom_call.1} parent=0 // pred_check_branch
    %899 = sbr.rel (0) target = $region33
  $region32: #{tpu_custom_call.1} parent=0 // pred_region
    _
  $region33: #{tpu_custom_call.1} parent=0 // pred_fallthru
    _
  // Predicated region
  $region34: #{tpu_custom_call.1} parent=0 // pred_check
    _
  $region35: #{tpu_custom_call.1} parent=0 // pred_check_branch
    %901 = sbr.rel (0) target = $region37
  $region36: #{tpu_custom_call.1} parent=0 // pred_region
    _
  $region37: #{tpu_custom_call.1} parent=0 // pred_fallthru
    _

</llo_original>
